<compile_context>
chip_gen: v5e
topology: v5e:2x2
jax: 0.10.0
libtpu: 0.0.40
codegen_flags: <defaults>
</compile_context>

<pallas_src>
import functools
import math

import jax
import jax.numpy as jnp
import numpy as np
from jax.experimental import pallas as pl
from jax.experimental.pallas import tpu as pltpu

EPS = 1e-5                           # PyTorch F.layer_norm default eps
_LANES = 128                         # TPU vreg lane width
_TARGET_BLOCK_BYTES = 2 * 1024 * 1024  # ~2 MiB per pipelined I/O block


def _cdiv(a, b):
    return -(-a // b)


def _round_up(a, b):
    return _cdiv(a, b) * b


def _pick_tile(n_rows, row_bytes, itemsize):
    """Row tile: ~2 MiB blocks, sublane aligned, >=2 grid steps when possible (v7x)."""
    sub = max(8, 32 // itemsize)     # 8 rows f32, 16 bf16, 32 for 8-bit dtypes
    if n_rows <= sub:
        return n_rows                # single full-extent block
    target = max(sub, (_TARGET_BLOCK_BYTES // row_bytes) // sub * sub)
    # Cap at ~half the rows so the 1-D grid has >=2 steps and ("parallel",) can
    # shard across both TensorCores on v7x; negligible overhead on 1-TC chips.
    half = _round_up(_cdiv(n_rows, 2), sub)
    return max(sub, min(target, half))


# -----------------------------------------------------------------------------
# Kernels
# -----------------------------------------------------------------------------

def _ln_packed_kernel(x_ref, gamma_ref, avg_ref, o_ref, *, eps):
    """Lane-packed LayerNorm: each 128-lane row holds P = 128 // D logical rows.

    avg_ref is a (128, 128) block-diagonal bf16 matrix with exact 1/D entries
    (D divides 128 => 1/D is a power of two), so `x @ avg` yields the
    per-logical-row mean already broadcast across its D-lane segment — one
    single-pass MXU matmul does reduce + broadcast.  f32 inputs are split into
    a bf16 (hi, lo) pair so two single-pass matmuls reach near-f32 accuracy
    without 6-pass HIGHEST-precision matmuls (keeps the kernel memory-bound).
    """
    x = x_ref[...].astype(jnp.float32)           # (T, 128)
    avg = avg_ref[...]                           # (128, 128) bf16, exact 1/D entries
    g = gamma_ref[...]                           # (1, 128) f32 (gamma tiled P times)

    def seg_mean(v):                             # segmented mean, bf16x2 via MXU
        hi = v.astype(jnp.bfloat16)
        lo = (v - hi.astype(jnp.float32)).astype(jnp.bfloat16)
        return (jnp.dot(hi, avg, preferred_element_type=jnp.float32)
                + jnp.dot(lo, avg, preferred_element_type=jnp.float32))

    mean = seg_mean(x)
    dev = x - mean
    var = seg_mean(dev * dev)                    # two-pass variance (no cancellation)
    inv = jax.lax.rsqrt(jnp.maximum(var, 0.0) + eps)
    o_ref[...] = (dev * inv * g).astype(o_ref.dtype)


def _ln_rows_kernel(x_ref, gamma_ref, o_ref, *, eps):
    """Generic LayerNorm over the last dim of a (T, D) tile (D on lanes), all f32."""
    x = x_ref[...].astype(jnp.float32)           # (T, D)
    d = x.shape[-1]
    mean = jnp.sum(x, axis=-1, keepdims=True) * (1.0 / d)
    dev = x - mean
    var = jnp.sum(dev * dev, axis=-1, keepdims=True) * (1.0 / d)
    inv = jax.lax.rsqrt(var + eps)
    o_ref[...] = (dev * inv * gamma_ref[...]).astype(o_ref.dtype)


# -----------------------------------------------------------------------------
# Wrapper
# -----------------------------------------------------------------------------

@functools.partial(jax.jit, static_argnames=("eps",))
def layer_norm_no_bias(x, gamma, *, eps=EPS):
    """LayerNorm over x.shape[-1:], affine weight=gamma.

    The module's `beta` is a registered buffer of zeros (never trained), so the
    bias add is elided entirely (one less DMA stream + VPU add, same result).
    """
    orig_shape = x.shape
    d = orig_shape[-1]
    n_rows = math.prod(orig_shape[:-1])
    itemsize = jnp.dtype(x.dtype).itemsize
    cparams = pltpu.CompilerParams(
        dimension_semantics=("parallel",),        # shard row grid across TCs (v7x)
        vmem_limit_bytes=48 * 1024 * 1024,        # fits v7x's 64 MiB VMEM with headroom
    )

    use_packed = (d < _LANES and _LANES % d == 0
                  and n_rows * d >= 8 * _LANES)   # >=8 packed rows -> aligned MXU tiles

    if use_packed:
        # ---- lane-packed path (small D): P logical rows per 128-lane row ----
        p = _LANES // d
        total = n_rows * d
        pad = _round_up(total, _LANES) - total    # <= 127 elements, usually 0
        x_flat = x.reshape(-1)                    # free for contiguous row-major x
        if pad:
            x_flat = jnp.pad(x_flat, (0, pad))
        x2 = x_flat.reshape(-1, _LANES)
        n_packed = x2.shape[0]
        tile = _pick_tile(n_packed, _LANES * itemsize, itemsize)

        gamma_p = jnp.tile(gamma.astype(jnp.float32).reshape(1, d), (1, p))
        seg = np.arange(_LANES) // d
        avg = jnp.asarray((seg[:, None] == seg[None, :]).astype(np.float32) / d,
                          dtype=jnp.bfloat16)     # 1/d is a power of two -> exact bf16

        out2 = pl.pallas_call(
            functools.partial(_ln_packed_kernel, eps=eps),
            out_shape=jax.ShapeDtypeStruct((n_packed, _LANES), x.dtype),
            grid_spec=pltpu.PrefetchScalarGridSpec(
                num_scalar_prefetch=0,
                grid=(pl.cdiv(n_packed, tile),),  # masked edge block; no wrapper pad/slice
                in_specs=[
                    pl.BlockSpec((tile, _LANES), lambda i: (i, 0)),
                    pl.BlockSpec((1, _LANES), lambda i: (0, 0)),
                    pl.BlockSpec((_LANES, _LANES), lambda i: (0, 0)),
                ],
                out_specs=pl.BlockSpec((tile, _LANES), lambda i: (i, 0)),
            ),
            compiler_params=cparams,
        )(x2, gamma_p, avg)

        out_flat = out2.reshape(-1)
        if pad:
            out_flat = out_flat[:total]
        return out_flat.reshape(orig_shape)

    # ---- generic path (D >= 128, D not dividing 128, or tiny inputs) --------
    x2 = x.reshape(n_rows, d)                     # free for contiguous row-major x
    tile = _pick_tile(n_rows, d * itemsize, itemsize)
    gamma2 = gamma.astype(jnp.float32).reshape(1, d)

    out2 = pl.pallas_call(
        functools.partial(_ln_rows_kernel, eps=eps),
        out_shape=jax.ShapeDtypeStruct((n_rows, d), x.dtype),
        grid_spec=pltpu.PrefetchScalarGridSpec(
            num_scalar_prefetch=0,
            grid=(pl.cdiv(n_rows, tile),),        # masked edge block handles remainder rows
            in_specs=[
                pl.BlockSpec((tile, d), lambda i: (i, 0)),
                pl.BlockSpec((1, d), lambda i: (0, 0)),
            ],
            out_specs=pl.BlockSpec((tile, d), lambda i: (i, 0)),
        ),
        compiler_params=cparams,
    )(x2, gamma2)

    return out2.reshape(orig_shape)


# -----------------------------------------------------------------------------
# Demo / self-check
# -----------------------------------------------------------------------------

def _ref_layer_norm(x, gamma, eps=EPS):
    # Pure-JAX reference == F.layer_norm(x, x.shape[-1:], weight=gamma, bias=zeros).
    m = jnp.mean(x, axis=-1, keepdims=True)
    v = jnp.mean((x - m) ** 2, axis=-1, keepdims=True)
    return (x - m) * jax.lax.rsqrt(v + eps) * gamma


if __name__ == "__main__":
    # Module: LayerNormNoBias(input_dim=32) applied to a (batch, seq, input_dim) tensor.
    input_dim = 32
    batch, seq = 2, 16

    key = jax.random.PRNGKey(0)
    x = jax.random.normal(key, (batch, seq, input_dim), dtype=jnp.float32)
    # Parameters as in __init__: gamma = ones; beta is a zeros *buffer* (add elided).
    gamma = jnp.ones((input_dim,), dtype=jnp.float32)

    y = layer_norm_no_bias(x, gamma)               # packed path, exact tile division
    jax.block_until_ready(y)
    assert y.shape == x.shape and y.dtype == x.dtype
    assert jnp.allclose(y, _ref_layer_norm(x, gamma), atol=2e-5, rtol=2e-5), \
        "packed path mismatch vs reference"

    # Packed path with a masked edge block (n_packed=10, tile=8 -> grid=2, partial last block).
    xe = jax.random.normal(jax.random.PRNGKey(3), (5, 8, input_dim), dtype=jnp.float32)
    ge = jax.random.normal(jax.random.PRNGKey(4), (input_dim,), dtype=jnp.float32)
    ye = layer_norm_no_bias(xe, ge)
    jax.block_until_ready(ye)
    assert jnp.allclose(ye, _ref_layer_norm(xe, ge), atol=2e-5, rtol=2e-5), \
        "packed edge-block mismatch vs reference"

    # Tiny input (falls back to generic path even for D=32).
    xt = jax.random.normal(jax.random.PRNGKey(5), (2, 8, input_dim), dtype=jnp.float32)
    yt = layer_norm_no_bias(xt, gamma)
    jax.block_until_ready(yt)
    assert jnp.allclose(yt, _ref_layer_norm(xt, gamma), atol=2e-5, rtol=2e-5), \
        "small-input generic path mismatch vs reference"

    # Generic path (D >= 128) with a masked edge block (21 rows, tile=16 -> grid=2).
    d2 = 256
    x2 = jax.random.normal(jax.random.PRNGKey(1), (3, 7, d2), dtype=jnp.float32)
    g2 = jax.random.normal(jax.random.PRNGKey(2), (d2,), dtype=jnp.float32)
    y2 = layer_norm_no_bias(x2, g2)
    jax.block_until_ready(y2)
    assert jnp.allclose(y2, _ref_layer_norm(x2, g2), atol=2e-5, rtol=2e-5), \
        "generic path mismatch vs reference"

    print("KERNEL_OK")
</pallas_src>

<mosaic_0001>
module attributes {stable_mosaic.version = 11 : i64} {
  func.func @_ln_packed_kernel(%arg0: i32, %arg1: memref<8x128xf32, #tpu.memory_space<vmem>>, %arg2: memref<1x128xf32, #tpu.memory_space<vmem>>, %arg3: memref<128x128xbf16, #tpu.memory_space<vmem>>, %arg4: memref<8x128xf32, #tpu.memory_space<vmem>>) attributes {dimension_semantics = [#tpu.dimension_semantics<parallel>], iteration_bounds = array<i64: 1>, scalar_prefetch = 0 : i64, scratch_operands = 0 : i64, tpu.core_type = #tpu.core_type<tc>, window_params = [{transform_indices = @transform_0, window_bounds = array<i64: 8, 128>}, {pipeline_mode = #tpu.pipeline_mode<synchronous>, transform_indices = @transform_1, window_bounds = array<i64: 1, 128>}, {pipeline_mode = #tpu.pipeline_mode<synchronous>, transform_indices = @transform_2, window_bounds = array<i64: 128, 128>}, {transform_indices = @transform_3, window_bounds = array<i64: 8, 128>}]} {
    %c0 = arith.constant 0 : index
    %c0_0 = arith.constant 0 : index
    %0 = vector.load %arg1[%c0, %c0_0] : memref<8x128xf32, #tpu.memory_space<vmem>>, vector<8x128xf32>
    %c0_1 = arith.constant 0 : index
    %c0_2 = arith.constant 0 : index
    %1 = vector.load %arg3[%c0_1, %c0_2] : memref<128x128xbf16, #tpu.memory_space<vmem>>, vector<128x128xbf16>
    %c0_3 = arith.constant 0 : index
    %c0_4 = arith.constant 0 : index
    %2 = vector.load %arg2[%c0_3, %c0_4] : memref<1x128xf32, #tpu.memory_space<vmem>>, vector<1x128xf32>
    %3 = arith.truncf %0 : vector<8x128xf32> to vector<8x128xbf16>
    %4 = arith.extf %3 : vector<8x128xbf16> to vector<8x128xf32>
    %5 = arith.subf %0, %4 : vector<8x128xf32>
    %6 = arith.truncf %5 : vector<8x128xf32> to vector<8x128xbf16>
    %cst = arith.constant dense<0.000000e+00> : vector<8x128xf32>
    %7 = tpu.matmul %3, %1, %cst {dimension_numbers = #tpu.dot_dimension_numbers<[1], [0], [0], [1], [0, 0, 1, 1], [], []>} : vector<8x128xbf16>, vector<128x128xbf16>, vector<8x128xf32> -> vector<8x128xf32>
    %cst_5 = arith.constant dense<0.000000e+00> : vector<8x128xf32>
    %8 = tpu.matmul %6, %1, %cst_5 {dimension_numbers = #tpu.dot_dimension_numbers<[1], [0], [0], [1], [0, 0, 1, 1], [], []>} : vector<8x128xbf16>, vector<128x128xbf16>, vector<8x128xf32> -> vector<8x128xf32>
    %9 = arith.addf %7, %8 : vector<8x128xf32>
    %10 = arith.subf %0, %9 : vector<8x128xf32>
    %11 = arith.mulf %10, %10 : vector<8x128xf32>
    %12 = arith.truncf %11 : vector<8x128xf32> to vector<8x128xbf16>
    %13 = arith.extf %12 : vector<8x128xbf16> to vector<8x128xf32>
    %14 = arith.subf %11, %13 : vector<8x128xf32>
    %15 = arith.truncf %14 : vector<8x128xf32> to vector<8x128xbf16>
    %cst_6 = arith.constant dense<0.000000e+00> : vector<8x128xf32>
    %16 = tpu.matmul %12, %1, %cst_6 {dimension_numbers = #tpu.dot_dimension_numbers<[1], [0], [0], [1], [0, 0, 1, 1], [], []>} : vector<8x128xbf16>, vector<128x128xbf16>, vector<8x128xf32> -> vector<8x128xf32>
    %cst_7 = arith.constant dense<0.000000e+00> : vector<8x128xf32>
    %17 = tpu.matmul %15, %1, %cst_7 {dimension_numbers = #tpu.dot_dimension_numbers<[1], [0], [0], [1], [0, 0, 1, 1], [], []>} : vector<8x128xbf16>, vector<128x128xbf16>, vector<8x128xf32> -> vector<8x128xf32>
    %18 = arith.addf %16, %17 : vector<8x128xf32>
    %cst_8 = arith.constant 0.000000e+00 : f32
    %19 = vector.broadcast %cst_8 : f32 to vector<8x128xf32>
    %20 = arith.maximumf %18, %19 : vector<8x128xf32>
    %cst_9 = arith.constant 9.99999974E-6 : f32
    %21 = vector.broadcast %cst_9 : f32 to vector<8x128xf32>
    %22 = arith.addf %20, %21 : vector<8x128xf32>
    %23 = math.rsqrt %22 : vector<8x128xf32>
    %24 = arith.mulf %10, %23 : vector<8x128xf32>
    %25 = vector.broadcast %2 : vector<1x128xf32> to vector<8x128xf32>
    %26 = arith.mulf %24, %25 : vector<8x128xf32>
    %c0_10 = arith.constant 0 : index
    %c0_11 = arith.constant 0 : index
    %27 = vector.load %arg4[%c0_10, %c0_11] : memref<8x128xf32, #tpu.memory_space<vmem>>, vector<8x128xf32>
    tpu.vector_store %arg4[%c0_10, %c0_11], %26 {strides = array<i32>} : memref<8x128xf32, #tpu.memory_space<vmem>>, vector<8x128xf32>,
    return
  }
  func.func @transform_0(%arg0: i32) -> (i32, i32) {
    %c0_i32 = arith.constant 0 : i32
    %c0_i32_0 = arith.constant 0 : i32
    return %arg0, %c0_i32 : i32, i32
  }
  func.func @transform_1(%arg0: i32) -> (i32, i32) {
    %c0_i32 = arith.constant 0 : i32
    %c0_i32_0 = arith.constant 0 : i32
    %c0_i32_1 = arith.constant 0 : i32
    return %c0_i32, %c0_i32_0 : i32, i32
  }
  func.func @transform_2(%arg0: i32) -> (i32, i32) {
    %c0_i32 = arith.constant 0 : i32
    %c0_i32_0 = arith.constant 0 : i32
    %c0_i32_1 = arith.constant 0 : i32
    return %c0_i32, %c0_i32_0 : i32, i32
  }
  func.func @transform_3(%arg0: i32) -> (i32, i32) {
    %c0_i32 = arith.constant 0 : i32
    %c0_i32_0 = arith.constant 0 : i32
    return %arg0, %c0_i32 : i32, i32
  }
}

</mosaic_0001>

<llo_original>
// kernel: layer_norm_no_bias.1
$region0: #{layer_norm_no_bias.1}
  #allocation0 [shape = 'u32[]', space=smem, size = 0x4, offset = 0x4, fixed_abs, tag = 'smem constant byte address 0x4 - core index']
  #allocation1 [shape = 'u32[72,128]{1,0:T(1,128)}', space=vmem, size = 0x9000, scoped, tag = 'internal scratch']
  %s0 = inlined_call_operand.vmem [shape: f32[8,128], index: 0, kind: input, shape index: {}]
  %s1 = inlined_call_operand.vmem [shape: f32[1,128], index: 1, kind: input, shape index: {}]
  %s2 = inlined_call_operand.hbm [shape: bf16[128,128], index: 2, kind: input, shape index: {}]
  %s3 = inlined_call_operand.vmem [shape: f32[8,128], index: 3, kind: output, shape index: {}]
  %s4 = sld [smem:[#allocation0]]
  $region26: #{layer_norm_no_bias.1} parent=0
    _
  %s6 = ssub.s32 1, %s4
  %s7 = scalar_select 0, %s6, %s4
  $region1: #{layer_norm_no_bias.1} parent=0
    #allocation2 [shape = 'u8[32768]{0}', space=vmem, size = 0x8000, scoped, tag = 'input window, operand 2, single buffered']
    #allocation3 [shape = 's32[1]{0}', space=sflag, size = 0x4, scoped, tag = 'scoped memory for layer_norm_no_bias.1']
    %8 = vsyncpa [#allocation3], 0
    // Predicated region
    $region2: #{layer_norm_no_bias.1} parent=1 // pred_check
      _
    $region3: #{layer_norm_no_bias.1} parent=1 // pred_check_branch
      %10 = sbr.rel (0) target = $region5
    $region4: #{layer_norm_no_bias.1} parent=1 // pred_region
      _
    $region5: #{layer_norm_no_bias.1} parent=1 // pred_fallthru
      _
    // Predicated region
    $region6: #{layer_norm_no_bias.1} parent=1 // pred_check
      _
    $region7: #{layer_norm_no_bias.1} parent=1 // pred_check_branch
      %12 = sbr.rel (0) target = $region9
    $region8: #{layer_norm_no_bias.1} parent=1 // pred_region
      _
    $region9: #{layer_norm_no_bias.1} parent=1 // pred_fallthru
      _
    // Predicated region
    $region10: #{layer_norm_no_bias.1} parent=1 // pred_check
      _
    $region11: #{layer_norm_no_bias.1} parent=1 // pred_check_branch
      %14 = sbr.rel (0) target = $region13
    $region12: #{layer_norm_no_bias.1} parent=1 // pred_region
      %16 = vsyncadd [#allocation3], 0
      %s17 = sshll.u32 %s2, 4
      %s18 = int_to_ptr.hbm [resolvable:$true] %s17
      %s19 = sshll.u32 [#allocation2], 4
      %s20 = int_to_ptr.vmem [resolvable:$true] %s19
      %25 = dma.hbm_to_vmem [thread:$0]  %s18, 1024, %s20, [#allocation3], 64, 64, 4
    $region13: #{layer_norm_no_bias.1} parent=1 // pred_fallthru
      _
    // Predicated region
    $region14: #{layer_norm_no_bias.1} parent=1 // pred_check
      _
    $region15: #{layer_norm_no_bias.1} parent=1 // pred_check_branch
      %27 = sbr.rel (0) target = $region17
    $region16: #{layer_norm_no_bias.1} parent=1 // pred_region
      %29 = dma.done [#allocation3], 1024
    $region17: #{layer_norm_no_bias.1} parent=1 // pred_fallthru
      _
    %v30 = vld [vmem:[%s0] sm:$0xff]
    %v31 = vld [vmem:[#allocation2] sm:$0xf]
    %v32 = vld [vmem:[#allocation2 + $0x4] sm:$0xf]
    %v33 = vld [vmem:[#allocation2 + $0x8] sm:$0xf]
    %v34 = vld [vmem:[#allocation2 + $0xc] sm:$0xf]
    %v35 = vld [vmem:[#allocation2 + $0x10] sm:$0xf]
    %v36 = vld [vmem:[#allocation2 + $0x14] sm:$0xf]
    %v37 = vld [vmem:[#allocation2 + $0x18] sm:$0xf]
    %v38 = vld [vmem:[#allocation2 + $0x1c] sm:$0xf]
    %v39 = vld [vmem:[#allocation2 + $0x20] sm:$0xf]
    %v40 = vld [vmem:[#allocation2 + $0x24] sm:$0xf]
    %v41 = vld [vmem:[#allocation2 + $0x28] sm:$0xf]
    %v42 = vld [vmem:[#allocation2 + $0x2c] sm:$0xf]
    %v43 = vld [vmem:[#allocation2 + $0x30] sm:$0xf]
    %v44 = vld [vmem:[#allocation2 + $0x34] sm:$0xf]
    %v45 = vld [vmem:[#allocation2 + $0x38] sm:$0xf]
    %v46 = vld [vmem:[#allocation2 + $0x3c] sm:$0xf]
    %v47 = vld [vmem:[%s1] sm:$0x1]
    %v48 = vpack.c.bf16 %v30, %v30
    %v49 = vunpack.c.l.bf16 %v48
    %v50 = vsub.f32 %v30, %v49
    %v51 = vpack.c.bf16 %v50, %v50
    %v68 = vunpack.c.l.b16 %v31
    %v69 = vunpack.c.l.b16 %v32
    %v70 = vunpack.c.l.b16 %v33
    %v71 = vunpack.c.l.b16 %v34
    %v72 = vunpack.c.l.b16 %v35
    %v73 = vunpack.c.l.b16 %v36
    %v74 = vunpack.c.l.b16 %v37
    %v75 = vunpack.c.l.b16 %v38
    %v76 = vunpack.c.l.b16 %v39
    %v77 = vunpack.c.l.b16 %v40
    %v78 = vunpack.c.l.b16 %v41
    %v79 = vunpack.c.l.b16 %v42
    %v80 = vunpack.c.l.b16 %v43
    %v81 = vunpack.c.l.b16 %v44
    %v82 = vunpack.c.l.b16 %v45
    %v83 = vunpack.c.l.b16 %v46
    %v84 = vpack.c.b16 %v69, %v68
    %v85 = vpack.c.b16 %v71, %v70
    %v86 = vpack.c.b16 %v73, %v72
    %v87 = vpack.c.b16 %v75, %v74
    %v88 = vpack.c.b16 %v77, %v76
    %v89 = vpack.c.b16 %v79, %v78
    %v90 = vpack.c.b16 %v81, %v80
    %v91 = vpack.c.b16 %v83, %v82
    %100 = vmatpush.bf16.msra.mxu0 %v91
    %101 = vmatpush.bf16.msra.mxu0 %v90
    %102 = vmatpush.bf16.msra.mxu0 %v89
    %103 = vmatpush.bf16.msra.mxu0 %v88
    %104 = vmatpush.bf16.msra.mxu0 %v87
    %105 = vmatpush.bf16.msra.mxu0 %v86
    %106 = vmatpush.bf16.msra.mxu0 %v85
    %107 = vmatpush.bf16.msra.mxu0 %v84
    %108 = vmatmul.bf16.gmra.mxu0 %v51
    %v109 = vpop.f32.mrf.mxu0
    %v110 = vadd.f32 0.0, %v109
    %v111 = vpop.f32.mrf.mxu0
    %112 = vdwg.mxu0
    %113 = vmatpush.bf16.msra.mxu0 %v91
    %114 = vmatpush.bf16.msra.mxu0 %v90
    %115 = vmatpush.bf16.msra.mxu0 %v89
    %116 = vmatpush.bf16.msra.mxu0 %v88
    %117 = vmatpush.bf16.msra.mxu0 %v87
    %118 = vmatpush.bf16.msra.mxu0 %v86
    %119 = vmatpush.bf16.msra.mxu0 %v85
    %120 = vmatpush.bf16.msra.mxu0 %v84
    %121 = vmatmul.bf16.gmra.mxu0 %v48
    %v122 = vpop.f32.mrf.mxu0
    %v123 = vadd.f32 %v110, %v122
    %v124 = vpop.f32.mrf.mxu0
    %125 = vdwg.mxu0
    %v126 = vsub.f32 %v30, %v123
    %v127 = vmul.f32 %v126, %v126
    %v128 = vpack.c.bf16 %v127, %v127
    %v129 = vunpack.c.l.bf16 %v128
    %v130 = vsub.f32 %v127, %v129
    %v131 = vpack.c.bf16 %v130, %v130
    %132 = vmatpush.bf16.msra.mxu0 %v91
    %133 = vmatpush.bf16.msra.mxu0 %v90
    %134 = vmatpush.bf16.msra.mxu0 %v89
    %135 = vmatpush.bf16.msra.mxu0 %v88
    %136 = vmatpush.bf16.msra.mxu0 %v87
    %137 = vmatpush.bf16.msra.mxu0 %v86
    %138 = vmatpush.bf16.msra.mxu0 %v85
    %139 = vmatpush.bf16.msra.mxu0 %v84
    %140 = vmatmul.bf16.gmra.mxu0 %v131
    %v141 = vpop.f32.mrf.mxu0
    %v142 = vadd.f32 0.0, %v141
    %v143 = vpop.f32.mrf.mxu0
    %144 = vdwg.mxu0
    %145 = vmatpush.bf16.msra.mxu0 %v91
    %146 = vmatpush.bf16.msra.mxu0 %v90
    %147 = vmatpush.bf16.msra.mxu0 %v89
    %148 = vmatpush.bf16.msra.mxu0 %v88
    %149 = vmatpush.bf16.msra.mxu0 %v87
    %150 = vmatpush.bf16.msra.mxu0 %v86
    %151 = vmatpush.bf16.msra.mxu0 %v85
    %152 = vmatpush.bf16.msra.mxu0 %v84
    %153 = vmatmul.bf16.gmra.mxu0 %v128
    %v154 = vpop.f32.mrf.mxu0
    %v155 = vadd.f32 %v142, %v154
    %v156 = vpop.f32.mrf.mxu0
    %157 = vdwg.mxu0
    %v158 = vmax.f32 %v155, 0.0
    %v159 = vadd.f32 %v158, 1e-05
    %v160 = vrsqrt.pop %v159
    %v161 = vmul.f32 %v160, %v159
    %v162 = vmul.f32 %v161, %v160
    %v163 = vmul.f32 0.5, %v162
    %v164 = vsub.f32 1.5, %v163
    %v165 = vmul.f32 %v160, %v164
    %vm166 = vweird.f32 %v159
    %vm167 = vweird.f32 %v160
    %vm168 = vmor %vm166, %vm167
    %v169 = vsel %vm168, %v160, %v165
    %v170 = vmul.f32 %v126, %v169
    %v172 = vperm.slane %v47, 0
    %v174 = vmul.f32 %v170, %v172
    %175 = vst [vmem:[%s3] sm:$0xff] %v174
    // Predicated region
    $region18: #{layer_norm_no_bias.1} parent=1 // pred_check
      _
    $region19: #{layer_norm_no_bias.1} parent=1 // pred_check_branch
      %177 = sbr.rel (0) target = $region21
    $region20: #{layer_norm_no_bias.1} parent=1 // pred_region
      _
    $region21: #{layer_norm_no_bias.1} parent=1 // pred_fallthru
      _
    // Predicated region
    $region22: #{layer_norm_no_bias.1} parent=1 // pred_check
      _
    $region23: #{layer_norm_no_bias.1} parent=1 // pred_check_branch
      %179 = sbr.rel (0) target = $region25
    $region24: #{layer_norm_no_bias.1} parent=1 // pred_region
      _
    $region25: #{layer_norm_no_bias.1} parent=1 // pred_fallthru
      _
    %180 = vsyncpa [#allocation3], 1

</llo_original>
